<compile_context>
chip_gen: v5e
topology: v5e:2x2
jax: 0.10.0
libtpu: 0.0.40
codegen_flags: <defaults>
</compile_context>

<pallas_src>
import jax
import jax.numpy as jnp
from jax.experimental import pallas as pl
from jax.experimental.pallas import tpu as pltpu

BOARD_X, BOARD_Y = 3, 3                      # TicTacToeGame.getBoardSize()
N_FEATURES = BOARD_X * BOARD_Y               # 9
ACTION_SIZE = N_FEATURES + 1                 # TicTacToeGame.getActionSize()
HIDDEN = 32
BN_EPS = 1e-5
OUT_LANES = 128                              # lane-dense padded output width


# ---------------------------------------------------------------------------
# Kernels
# ---------------------------------------------------------------------------
def bn_stats_kernel(x_ref, wstack_ref, pv_ref, stats_ref):
    """Pass 1: compute global training-mode BN mean / inv_std for all 3 BNs."""
    x = x_ref[...]                                   # [B, 32] (zero-padded feats)
    pv = pv_ref[...]                                 # [8, 128] packed vectors

    g1, be1 = pv[0:1, :HIDDEN], pv[1:2, :HIDDEN]
    gr1, ber1 = pv[2:3, :HIDDEN], pv[3:4, :HIDDEN]

    nb = x.shape[0]
    ones = jnp.ones((1, nb), jnp.float32)
    inv_n = 1.0 / nb

    def moments(h):
        # Batch-axis reductions on the MXU (ones-vector matmuls) instead of
        # XLU axis-0 reductions: MXU slot is nearly idle in this kernel.
        mu = jnp.dot(ones, h, preferred_element_type=jnp.float32) * inv_n
        var = jnp.dot(ones, (h - mu) ** 2,
                      preferred_element_type=jnp.float32) * inv_n
        return mu, jax.lax.rsqrt(var + BN_EPS)

    # layer 1 (fc1 bias dropped: cancelled by BN mean subtraction)
    h1 = jnp.dot(x, wstack_ref[0], preferred_element_type=jnp.float32)
    m1, i1 = moments(h1)
    a1 = jnp.maximum((h1 - m1) * i1 * g1 + be1, 0.0)

    # res_block1 pre-activation
    h2 = jnp.dot(a1, wstack_ref[1], preferred_element_type=jnp.float32)
    m2, i2 = moments(h2)
    a2 = jnp.maximum((h2 - m2) * i2 * gr1 + ber1, 0.0) + a1

    # res_block2 pre-activation
    h3 = jnp.dot(a2, wstack_ref[2], preferred_element_type=jnp.float32)
    m3, i3 = moments(h3)

    stats_ref[...] = jnp.zeros_like(stats_ref)
    stats_ref[0:1, 0:HIDDEN] = m1
    stats_ref[1:2, 0:HIDDEN] = i1
    stats_ref[2:3, 0:HIDDEN] = m2
    stats_ref[3:4, 0:HIDDEN] = i2
    stats_ref[4:5, 0:HIDDEN] = m3
    stats_ref[5:6, 0:HIDDEN] = i3


def main_kernel(x_ref, wstack_ref, wh_ref, pv_ref, stats_ref, out_ref):
    """Pass 2 (gridded over batch tiles): full forward with precomputed stats."""
    x = x_ref[...]                                   # [tile, 32]
    pv = pv_ref[...]                                 # [8, 128]
    st = stats_ref[...]                              # [8, 128]

    g1, be1 = pv[0:1, :HIDDEN], pv[1:2, :HIDDEN]
    gr1, ber1 = pv[2:3, :HIDDEN], pv[3:4, :HIDDEN]
    gr2, ber2 = pv[4:5, :HIDDEN], pv[5:6, :HIDDEN]
    bh = pv[6:7, :]                                  # fused head bias, [1, 128]

    m1, i1 = st[0:1, :HIDDEN], st[1:2, :HIDDEN]
    m2, i2 = st[2:3, :HIDDEN], st[3:4, :HIDDEN]
    m3, i3 = st[4:5, :HIDDEN], st[5:6, :HIDDEN]

    # s = relu(fc_bn1(fc1(s)))
    h = jnp.dot(x, wstack_ref[0], preferred_element_type=jnp.float32)
    h = jnp.maximum((h - m1) * i1 * g1 + be1, 0.0)

    # res_block1: relu(bn(fc(x))) + x
    r = h
    t = jnp.dot(h, wstack_ref[1], preferred_element_type=jnp.float32)
    h = jnp.maximum((t - m2) * i2 * gr1 + ber1, 0.0) + r

    # res_block2
    r = h
    t = jnp.dot(h, wstack_ref[2], preferred_element_type=jnp.float32)
    h = jnp.maximum((t - m3) * i3 * gr2 + ber2, 0.0) + r

    # fused policy + value head: one matmul, lane-dense [tile, 128] result
    hd = jnp.dot(h, wh_ref[...], preferred_element_type=jnp.float32) + bh

    lane = jax.lax.broadcasted_iota(jnp.int32, hd.shape, 1)
    pol_mask = lane < ACTION_SIZE                    # lanes 0..9  -> policy
    val_mask = lane == ACTION_SIZE                   # lane 10     -> value

    # log_softmax over the policy lanes only (wh/bh lanes >= 11 are zero-padded)
    z = jnp.where(pol_mask, hd, -jnp.inf)
    m = jnp.max(z, axis=1, keepdims=True)
    e = jnp.exp(z - m)
    lse = jnp.log(jnp.sum(e, axis=1, keepdims=True))
    logpi = hd - m - lse

    out_ref[...] = jnp.where(pol_mask, logpi,
                             jnp.where(val_mask, jnp.tanh(hd), 0.0))


# ---------------------------------------------------------------------------
# Packing / wrapper
# ---------------------------------------------------------------------------
def pack_params(p):
    """Pack PyTorch-style params into the 3 weight blocks the kernels consume."""
    # fold fc1 into the residual weight stack: zero-pad K from 9 to 32
    w1_pad = jnp.zeros((HIDDEN, HIDDEN), jnp.float32)
    w1_pad = w1_pad.at[:N_FEATURES, :].set(p["w1"])
    wstack = jnp.stack([w1_pad, p["wr1"], p["wr2"]], axis=0)   # [3, 32, 32]

    # fused head weight: cols 0..9 = policy, col 10 = value, rest zeros
    wh = jnp.zeros((HIDDEN, OUT_LANES), jnp.float32)
    wh = wh.at[:, :ACTION_SIZE].set(p["wp"])
    wh = wh.at[:, ACTION_SIZE:ACTION_SIZE + 1].set(p["wv"])

    # fused head bias, padded to 128 lanes
    bh = jnp.zeros((OUT_LANES,), jnp.float32)
    bh = bh.at[:ACTION_SIZE].set(p["bp"][0])
    bh = bh.at[ACTION_SIZE].set(p["bv"][0, 0])

    # one [8,128] block holding every small per-feature vector (one DMA)
    pv = jnp.zeros((8, OUT_LANES), jnp.float32)
    pv = pv.at[0, :HIDDEN].set(p["g1"][0])
    pv = pv.at[1, :HIDDEN].set(p["be1"][0])
    pv = pv.at[2, :HIDDEN].set(p["gr1"][0])
    pv = pv.at[3, :HIDDEN].set(p["ber1"][0])
    pv = pv.at[4, :HIDDEN].set(p["gr2"][0])
    pv = pv.at[5, :HIDDEN].set(p["ber2"][0])
    pv = pv.at[6].set(bh)

    return wstack, wh, pv


def tictactoe_forward(s, packed, *, tile=None):
    wstack, wh, pv = packed
    B = s.shape[0]
    x = s.reshape(B, N_FEATURES).astype(jnp.float32)
    # zero-pad features 9 -> 32 so every matmul has an aligned K=32
    x = jnp.pad(x, ((0, 0), (0, HIDDEN - N_FEATURES)))

    vmem = pl.BlockSpec(memory_space=pltpu.MemorySpace.VMEM)

    # --- pass 1: global BN statistics (training mode => stats over full batch)
    stats = pl.pallas_call(
        bn_stats_kernel,
        out_shape=jax.ShapeDtypeStruct((8, OUT_LANES), jnp.float32),
        in_specs=[vmem, vmem, vmem],
        out_specs=vmem,
        cost_estimate=pl.CostEstimate(
            flops=2 * B * HIDDEN * HIDDEN * 3 + 8 * B * HIDDEN * 3,
            transcendentals=3 * HIDDEN,
            bytes_accessed=4 * (B * HIDDEN + 3 * HIDDEN * HIDDEN
                                + 2 * 8 * OUT_LANES)),
    )(x, wstack, pv)

    # --- pass 2: main forward, gridded over batch tiles (weights pinned)
    if tile is None:
        tile = 8 if B <= 128 else 128
    b_pad = ((B + tile - 1) // tile) * tile
    if b_pad != B:
        x = jnp.pad(x, ((0, b_pad - B), (0, 0)))
    grid = (b_pad // tile,)

    out = pl.pallas_call(
        main_kernel,
        out_shape=jax.ShapeDtypeStruct((b_pad, OUT_LANES), jnp.float32),
        grid=grid,
        in_specs=[
            pl.BlockSpec((tile, HIDDEN), lambda i: (i, 0)),          # x streams
            pl.BlockSpec((3, HIDDEN, HIDDEN), lambda i: (0, 0, 0)),  # pinned
            pl.BlockSpec((HIDDEN, OUT_LANES), lambda i: (0, 0)),     # pinned
            pl.BlockSpec((8, OUT_LANES), lambda i: (0, 0)),          # pinned
            pl.BlockSpec((8, OUT_LANES), lambda i: (0, 0)),          # pinned
        ],
        out_specs=pl.BlockSpec((tile, OUT_LANES), lambda i: (i, 0)),
        compiler_params=pltpu.CompilerParams(
            dimension_semantics=("parallel",),        # 2 TCs on v7x, neutral else
            vmem_limit_bytes=32 * 1024 * 1024),       # sized for v7x budget
        cost_estimate=pl.CostEstimate(
            flops=2 * b_pad * (3 * HIDDEN * HIDDEN + HIDDEN * OUT_LANES),
            transcendentals=b_pad * (OUT_LANES + 2),
            bytes_accessed=4 * (b_pad * (HIDDEN + OUT_LANES)
                                + 3 * HIDDEN * HIDDEN + HIDDEN * OUT_LANES
                                + 2 * 8 * OUT_LANES)),
    )(x, wstack, wh, pv, stats)

    log_pi = out[:B, :ACTION_SIZE]
    value = out[:B, ACTION_SIZE:ACTION_SIZE + 1]
    return log_pi, value


# ---------------------------------------------------------------------------
# Init + pure-JAX reference (mirrors PyTorch exactly, incl. the BN-cancelled
# linear biases)
# ---------------------------------------------------------------------------
def _linear_init(key, fan_in, fan_out):
    # matches torch.nn.Linear default: U(-1/sqrt(fan_in), 1/sqrt(fan_in))
    kw, kb = jax.random.split(key)
    bound = 1.0 / (fan_in ** 0.5)
    w = jax.random.uniform(kw, (fan_in, fan_out), jnp.float32, -bound, bound)
    b = jax.random.uniform(kb, (1, fan_out), jnp.float32, -bound, bound)
    return w, b


def init_params(key):
    k1, k2, k3, k4, k5 = jax.random.split(key, 5)
    p = {}
    p["w1"], p["b1"] = _linear_init(k1, N_FEATURES, HIDDEN)
    p["wr1"], p["br1"] = _linear_init(k2, HIDDEN, HIDDEN)
    p["wr2"], p["br2"] = _linear_init(k3, HIDDEN, HIDDEN)
    p["wp"], p["bp"] = _linear_init(k4, HIDDEN, ACTION_SIZE)
    p["wv"], p["bv"] = _linear_init(k5, HIDDEN, 1)
    # BatchNorm1d affine params (PyTorch default init: gamma=1, beta=0)
    for name in ("g1", "gr1", "gr2"):
        p[name] = jnp.ones((1, HIDDEN), jnp.float32)
    for name in ("be1", "ber1", "ber2"):
        p[name] = jnp.zeros((1, HIDDEN), jnp.float32)
    return p


def _bn_train(h, gamma, beta):
    mean = jnp.mean(h, axis=0, keepdims=True)
    var = jnp.mean((h - mean) ** 2, axis=0, keepdims=True)
    return (h - mean) * jax.lax.rsqrt(var + BN_EPS) * gamma + beta


def _reference_forward(s, p):
    B = s.shape[0]
    x = s.reshape(B, N_FEATURES).astype(jnp.float32)
    h = jnp.maximum(_bn_train(x @ p["w1"] + p["b1"], p["g1"], p["be1"]), 0.0)
    h = jnp.maximum(_bn_train(h @ p["wr1"] + p["br1"], p["gr1"], p["ber1"]), 0.0) + h
    h = jnp.maximum(_bn_train(h @ p["wr2"] + p["br2"], p["gr2"], p["ber2"]), 0.0) + h
    logits = h @ p["wp"] + p["bp"]
    logpi = logits - jax.scipy.special.logsumexp(logits, axis=1, keepdims=True)
    v = jnp.tanh(h @ p["wv"] + p["bv"])
    return logpi, v


if __name__ == "__main__":
    key = jax.random.PRNGKey(0)
    pkey, xkey = jax.random.split(key)
    params = init_params(pkey)
    packed = pack_params(params)

    batch = 8
    s = jax.random.normal(xkey, (batch, BOARD_X, BOARD_Y), jnp.float32)

    log_pi, value = tictactoe_forward(s, packed)
    jax.block_until_ready((log_pi, value))

    ref_pi, ref_v = _reference_forward(s, params)
    assert log_pi.shape == (batch, ACTION_SIZE) and value.shape == (batch, 1)
    assert jnp.allclose(log_pi, ref_pi, atol=1e-4, rtol=1e-4)
    assert jnp.allclose(value, ref_v, atol=1e-4, rtol=1e-4)
    # log_softmax rows must exponentiate-sum to 1
    assert jnp.allclose(jnp.sum(jnp.exp(log_pi), axis=1), 1.0, atol=1e-4)

    print("KERNEL_OK")
</pallas_src>

<mosaic_0001>
module attributes {stable_mosaic.version = 11 : i64} {
  func.func @bn_stats_kernel(%arg0: memref<8x32xf32, #tpu.memory_space<vmem>>, %arg1: memref<3x32x32xf32, #tpu.memory_space<vmem>>, %arg2: memref<8x128xf32, #tpu.memory_space<vmem>>, %arg3: memref<8x128xf32, #tpu.memory_space<vmem>>) attributes {dimension_semantics = [], scalar_prefetch = 0 : i64, scratch_operands = 0 : i64, tpu.core_type = #tpu.core_type<tc>} {
    %c0 = arith.constant 0 : index
    %c0_0 = arith.constant 0 : index
    %0 = vector.load %arg0[%c0, %c0_0] : memref<8x32xf32, #tpu.memory_space<vmem>>, vector<8x32xf32>
    %c0_1 = arith.constant 0 : index
    %c0_2 = arith.constant 0 : index
    %1 = vector.load %arg2[%c0_1, %c0_2] : memref<8x128xf32, #tpu.memory_space<vmem>>, vector<8x128xf32>
    %2 = vector.extract_strided_slice %1 {offsets = [0, 0], sizes = [1, 32], strides = [1, 1]} : vector<8x128xf32> to vector<1x32xf32>
    %3 = vector.extract_strided_slice %1 {offsets = [1, 0], sizes = [1, 32], strides = [1, 1]} : vector<8x128xf32> to vector<1x32xf32>
    %4 = vector.extract_strided_slice %1 {offsets = [2, 0], sizes = [1, 32], strides = [1, 1]} : vector<8x128xf32> to vector<1x32xf32>
    %5 = vector.extract_strided_slice %1 {offsets = [3, 0], sizes = [1, 32], strides = [1, 1]} : vector<8x128xf32> to vector<1x32xf32>
    %cst = arith.constant 1.000000e+00 : f32
    %6 = vector.broadcast %cst : f32 to vector<1x8xf32>
    %c0_3 = arith.constant 0 : index
    %c0_4 = arith.constant 0 : index
    %c0_5 = arith.constant 0 : index
    %7 = vector.load %arg1[%c0_3, %c0_4, %c0_5] : memref<3x32x32xf32, #tpu.memory_space<vmem>>, vector<1x32x32xf32>
    %8 = vector.shape_cast %7 : vector<1x32x32xf32> to vector<32x32xf32>
    %cst_6 = arith.constant dense<0.000000e+00> : vector<8x32xf32>
    %9 = tpu.matmul %0, %8, %cst_6 {dimension_numbers = #tpu.dot_dimension_numbers<[1], [0], [0], [1], [0, 0, 1, 1], [], []>} : vector<8x32xf32>, vector<32x32xf32>, vector<8x32xf32> -> vector<8x32xf32>
    %cst_7 = arith.constant dense<0.000000e+00> : vector<1x32xf32>
    %10 = tpu.matmul %6, %9, %cst_7 {dimension_numbers = #tpu.dot_dimension_numbers<[1], [0], [0], [1], [0, 0, 1, 1], [], []>} : vector<1x8xf32>, vector<8x32xf32>, vector<1x32xf32> -> vector<1x32xf32>
    %cst_8 = arith.constant 1.250000e-01 : f32
    %11 = vector.broadcast %cst_8 : f32 to vector<1x32xf32>
    %12 = arith.mulf %10, %11 : vector<1x32xf32>
    %13 = vector.broadcast %12 : vector<1x32xf32> to vector<8x32xf32>
    %14 = arith.subf %9, %13 : vector<8x32xf32>
    %15 = arith.mulf %14, %14 : vector<8x32xf32>
    %cst_9 = arith.constant dense<0.000000e+00> : vector<1x32xf32>
    %16 = tpu.matmul %6, %15, %cst_9 {dimension_numbers = #tpu.dot_dimension_numbers<[1], [0], [0], [1], [0, 0, 1, 1], [], []>} : vector<1x8xf32>, vector<8x32xf32>, vector<1x32xf32> -> vector<1x32xf32>
    %cst_10 = arith.constant 1.250000e-01 : f32
    %17 = vector.broadcast %cst_10 : f32 to vector<1x32xf32>
    %18 = arith.mulf %16, %17 : vector<1x32xf32>
    %cst_11 = arith.constant 9.99999974E-6 : f32
    %19 = vector.broadcast %cst_11 : f32 to vector<1x32xf32>
    %20 = arith.addf %18, %19 : vector<1x32xf32>
    %21 = math.rsqrt %20 : vector<1x32xf32>
    %22 = vector.broadcast %12 : vector<1x32xf32> to vector<8x32xf32>
    %23 = arith.subf %9, %22 : vector<8x32xf32>
    %24 = vector.broadcast %21 : vector<1x32xf32> to vector<8x32xf32>
    %25 = arith.mulf %23, %24 : vector<8x32xf32>
    %26 = vector.broadcast %2 : vector<1x32xf32> to vector<8x32xf32>
    %27 = arith.mulf %25, %26 : vector<8x32xf32>
    %28 = vector.broadcast %3 : vector<1x32xf32> to vector<8x32xf32>
    %29 = arith.addf %27, %28 : vector<8x32xf32>
    %cst_12 = arith.constant 0.000000e+00 : f32
    %30 = vector.broadcast %cst_12 : f32 to vector<8x32xf32>
    %31 = arith.maximumf %29, %30 : vector<8x32xf32>
    %c1 = arith.constant 1 : index
    %c0_13 = arith.constant 0 : index
    %c0_14 = arith.constant 0 : index
    %32 = vector.load %arg1[%c1, %c0_13, %c0_14] : memref<3x32x32xf32, #tpu.memory_space<vmem>>, vector<1x32x32xf32>
    %33 = vector.shape_cast %32 : vector<1x32x32xf32> to vector<32x32xf32>
    %cst_15 = arith.constant dense<0.000000e+00> : vector<8x32xf32>
    %34 = tpu.matmul %31, %33, %cst_15 {dimension_numbers = #tpu.dot_dimension_numbers<[1], [0], [0], [1], [0, 0, 1, 1], [], []>} : vector<8x32xf32>, vector<32x32xf32>, vector<8x32xf32> -> vector<8x32xf32>
    %cst_16 = arith.constant dense<0.000000e+00> : vector<1x32xf32>
    %35 = tpu.matmul %6, %34, %cst_16 {dimension_numbers = #tpu.dot_dimension_numbers<[1], [0], [0], [1], [0, 0, 1, 1], [], []>} : vector<1x8xf32>, vector<8x32xf32>, vector<1x32xf32> -> vector<1x32xf32>
    %cst_17 = arith.constant 1.250000e-01 : f32
    %36 = vector.broadcast %cst_17 : f32 to vector<1x32xf32>
    %37 = arith.mulf %35, %36 : vector<1x32xf32>
    %38 = vector.broadcast %37 : vector<1x32xf32> to vector<8x32xf32>
    %39 = arith.subf %34, %38 : vector<8x32xf32>
    %40 = arith.mulf %39, %39 : vector<8x32xf32>
    %cst_18 = arith.constant dense<0.000000e+00> : vector<1x32xf32>
    %41 = tpu.matmul %6, %40, %cst_18 {dimension_numbers = #tpu.dot_dimension_numbers<[1], [0], [0], [1], [0, 0, 1, 1], [], []>} : vector<1x8xf32>, vector<8x32xf32>, vector<1x32xf32> -> vector<1x32xf32>
    %cst_19 = arith.constant 1.250000e-01 : f32
    %42 = vector.broadcast %cst_19 : f32 to vector<1x32xf32>
    %43 = arith.mulf %41, %42 : vector<1x32xf32>
    %cst_20 = arith.constant 9.99999974E-6 : f32
    %44 = vector.broadcast %cst_20 : f32 to vector<1x32xf32>
    %45 = arith.addf %43, %44 : vector<1x32xf32>
    %46 = math.rsqrt %45 : vector<1x32xf32>
    %47 = vector.broadcast %37 : vector<1x32xf32> to vector<8x32xf32>
    %48 = arith.subf %34, %47 : vector<8x32xf32>
    %49 = vector.broadcast %46 : vector<1x32xf32> to vector<8x32xf32>
    %50 = arith.mulf %48, %49 : vector<8x32xf32>
    %51 = vector.broadcast %4 : vector<1x32xf32> to vector<8x32xf32>
    %52 = arith.mulf %50, %51 : vector<8x32xf32>
    %53 = vector.broadcast %5 : vector<1x32xf32> to vector<8x32xf32>
    %54 = arith.addf %52, %53 : vector<8x32xf32>
    %cst_21 = arith.constant 0.000000e+00 : f32
    %55 = vector.broadcast %cst_21 : f32 to vector<8x32xf32>
    %56 = arith.maximumf %54, %55 : vector<8x32xf32>
    %57 = arith.addf %56, %31 : vector<8x32xf32>
    %c2 = arith.constant 2 : index
    %c0_22 = arith.constant 0 : index
    %c0_23 = arith.constant 0 : index
    %58 = vector.load %arg1[%c2, %c0_22, %c0_23] : memref<3x32x32xf32, #tpu.memory_space<vmem>>, vector<1x32x32xf32>
    %59 = vector.shape_cast %58 : vector<1x32x32xf32> to vector<32x32xf32>
    %cst_24 = arith.constant dense<0.000000e+00> : vector<8x32xf32>
    %60 = tpu.matmul %57, %59, %cst_24 {dimension_numbers = #tpu.dot_dimension_numbers<[1], [0], [0], [1], [0, 0, 1, 1], [], []>} : vector<8x32xf32>, vector<32x32xf32>, vector<8x32xf32> -> vector<8x32xf32>
    %cst_25 = arith.constant dense<0.000000e+00> : vector<1x32xf32>
    %61 = tpu.matmul %6, %60, %cst_25 {dimension_numbers = #tpu.dot_dimension_numbers<[1], [0], [0], [1], [0, 0, 1, 1], [], []>} : vector<1x8xf32>, vector<8x32xf32>, vector<1x32xf32> -> vector<1x32xf32>
    %cst_26 = arith.constant 1.250000e-01 : f32
    %62 = vector.broadcast %cst_26 : f32 to vector<1x32xf32>
    %63 = arith.mulf %61, %62 : vector<1x32xf32>
    %64 = vector.broadcast %63 : vector<1x32xf32> to vector<8x32xf32>
    %65 = arith.subf %60, %64 : vector<8x32xf32>
    %66 = arith.mulf %65, %65 : vector<8x32xf32>
    %cst_27 = arith.constant dense<0.000000e+00> : vector<1x32xf32>
    %67 = tpu.matmul %6, %66, %cst_27 {dimension_numbers = #tpu.dot_dimension_numbers<[1], [0], [0], [1], [0, 0, 1, 1], [], []>} : vector<1x8xf32>, vector<8x32xf32>, vector<1x32xf32> -> vector<1x32xf32>
    %cst_28 = arith.constant 1.250000e-01 : f32
    %68 = vector.broadcast %cst_28 : f32 to vector<1x32xf32>
    %69 = arith.mulf %67, %68 : vector<1x32xf32>
    %cst_29 = arith.constant 9.99999974E-6 : f32
    %70 = vector.broadcast %cst_29 : f32 to vector<1x32xf32>
    %71 = arith.addf %69, %70 : vector<1x32xf32>
    %72 = math.rsqrt %71 : vector<1x32xf32>
    %cst_30 = arith.constant 0.000000e+00 : f32
    %73 = vector.broadcast %cst_30 : f32 to vector<8x128xf32>
    %c0_31 = arith.constant 0 : index
    %c0_32 = arith.constant 0 : index
    %74 = vector.load %arg3[%c0_31, %c0_32] : memref<8x128xf32, #tpu.memory_space<vmem>>, vector<8x128xf32>
    tpu.vector_store %arg3[%c0_31, %c0_32], %73 {strides = array<i32>} : memref<8x128xf32, #tpu.memory_space<vmem>>, vector<8x128xf32>,
    %c0_33 = arith.constant 0 : index
    %c0_34 = arith.constant 0 : index
    %75 = vector.load %arg3[%c0_33, %c0_34] : memref<8x128xf32, #tpu.memory_space<vmem>>, vector<1x32xf32>
    tpu.vector_store %arg3[%c0_33, %c0_34], %12 {strides = array<i32>} : memref<8x128xf32, #tpu.memory_space<vmem>>, vector<1x32xf32>,
    %c1_35 = arith.constant 1 : index
    %c0_36 = arith.constant 0 : index
    %76 = vector.load %arg3[%c1_35, %c0_36] : memref<8x128xf32, #tpu.memory_space<vmem>>, vector<1x32xf32>
    tpu.vector_store %arg3[%c1_35, %c0_36], %21 {strides = array<i32>} : memref<8x128xf32, #tpu.memory_space<vmem>>, vector<1x32xf32>,
    %c2_37 = arith.constant 2 : index
    %c0_38 = arith.constant 0 : index
    %77 = vector.load %arg3[%c2_37, %c0_38] : memref<8x128xf32, #tpu.memory_space<vmem>>, vector<1x32xf32>
    tpu.vector_store %arg3[%c2_37, %c0_38], %37 {strides = array<i32>} : memref<8x128xf32, #tpu.memory_space<vmem>>, vector<1x32xf32>,
    %c3 = arith.constant 3 : index
    %c0_39 = arith.constant 0 : index
    %78 = vector.load %arg3[%c3, %c0_39] : memref<8x128xf32, #tpu.memory_space<vmem>>, vector<1x32xf32>
    tpu.vector_store %arg3[%c3, %c0_39], %46 {strides = array<i32>} : memref<8x128xf32, #tpu.memory_space<vmem>>, vector<1x32xf32>,
    %c4 = arith.constant 4 : index
    %c0_40 = arith.constant 0 : index
    %79 = vector.load %arg3[%c4, %c0_40] : memref<8x128xf32, #tpu.memory_space<vmem>>, vector<1x32xf32>
    tpu.vector_store %arg3[%c4, %c0_40], %63 {strides = array<i32>} : memref<8x128xf32, #tpu.memory_space<vmem>>, vector<1x32xf32>,
    %c5 = arith.constant 5 : index
    %c0_41 = arith.constant 0 : index
    %80 = vector.load %arg3[%c5, %c0_41] : memref<8x128xf32, #tpu.memory_space<vmem>>, vector<1x32xf32>
    tpu.vector_store %arg3[%c5, %c0_41], %72 {strides = array<i32>} : memref<8x128xf32, #tpu.memory_space<vmem>>, vector<1x32xf32>,
    return
  }
}

</mosaic_0001>

<llo_original>
// kernel: tpu_custom_call.1
$region0: #{tpu_custom_call.1}
  #allocation0 [shape = 'u32[]', space=smem, size = 0x4, offset = 0x4, fixed_abs, tag = 'smem constant byte address 0x4 - core index']
  #allocation1 [shape = 'u32[72,128]{1,0:T(1,128)}', space=vmem, size = 0x9000, scoped, tag = 'internal scratch']
  %s0 = inlined_call_operand.hbm [shape: f32[8,32], index: 0, kind: input, shape index: {}]
  %s1 = inlined_call_operand.hbm [shape: f32[3,32,32], index: 1, kind: input, shape index: {}]
  %s2 = inlined_call_operand.hbm [shape: f32[8,128], index: 2, kind: input, shape index: {}]
  %s3 = inlined_call_operand.hbm [shape: f32[8,128], index: 3, kind: output, shape index: {}]
  %s4 = sld [smem:[#allocation0]]
  $region34: #{tpu_custom_call.1} parent=0
    _
  %s6 = ssub.s32 1, %s4
  %s7 = scalar_select 0, %s6, %s4
  $region1: #{tpu_custom_call.1} parent=0
    #allocation2 [shape = 'u8[4096]{0}', space=vmem, size = 0x1000, scoped, tag = 'input window, operand 0, single buffered']
    #allocation3 [shape = 's32[1]{0}', space=sflag, size = 0x4, scoped, tag = 'scoped memory for tpu_custom_call.1']
    #allocation4 [shape = 's32[1]{0}', space=sflag, size = 0x4, scoped, tag = 'scoped memory for tpu_custom_call.1']
    #allocation5 [shape = 'u8[49152]{0}', space=vmem, size = 0xc000, scoped, tag = 'input window, operand 1, single buffered']
    #allocation6 [shape = 's32[1]{0}', space=sflag, size = 0x4, scoped, tag = 'scoped memory for tpu_custom_call.1']
    #allocation7 [shape = 'u8[4096]{0}', space=vmem, size = 0x1000, scoped, tag = 'input window, operand 2, single buffered']
    #allocation8 [shape = 'u8[4096]{0}', space=vmem, size = 0x1000, scoped, tag = 'output window, operand 0, single buffered']
    %8 = vsyncpa [#allocation3], 0
    %9 = vsyncpa [#allocation6], 0
    %10 = vsyncpa [#allocation4], 0
    // Predicated region
    $region2: #{tpu_custom_call.1} parent=1 // pred_check
      _
    $region3: #{tpu_custom_call.1} parent=1 // pred_check_branch
      %12 = sbr.rel (0) target = $region5
    $region4: #{tpu_custom_call.1} parent=1 // pred_region
      %14 = vsyncadd [#allocation3], 0
      %s16 = sshll.u32 %s0, 4
      %s17 = int_to_ptr.hbm [resolvable:$true] %s16
      %s18 = sshll.u32 [#allocation2], 4
      %s19 = int_to_ptr.vmem [resolvable:$true] %s18
      %21 = dma.hbm_to_vmem [thread:$0]  %s17, 128, %s19, [#allocation3]
    $region5: #{tpu_custom_call.1} parent=1 // pred_fallthru
      _
    // Predicated region
    $region6: #{tpu_custom_call.1} parent=1 // pred_check
      _
    $region7: #{tpu_custom_call.1} parent=1 // pred_check_branch
      %23 = sbr.rel (0) target = $region9
    $region8: #{tpu_custom_call.1} parent=1 // pred_region
      %25 = vsyncadd [#allocation6], 0
      %s26 = sshll.u32 %s1, 4
      %s27 = int_to_ptr.hbm [resolvable:$true] %s26
      %s28 = sshll.u32 [#allocation5], 4
      %s29 = int_to_ptr.vmem [resolvable:$true] %s28
      %34 = dma.hbm_to_vmem [thread:$0]  %s27, 1536, %s29, [#allocation6], 128, 128, 8
    $region9: #{tpu_custom_call.1} parent=1 // pred_fallthru
      _
    // Predicated region
    $region10: #{tpu_custom_call.1} parent=1 // pred_check
      _
    $region11: #{tpu_custom_call.1} parent=1 // pred_check_branch
      %36 = sbr.rel (0) target = $region13
    $region12: #{tpu_custom_call.1} parent=1 // pred_region
      %38 = vsyncadd [#allocation6], 0
      %s40 = sshll.u32 %s2, 4
      %s41 = int_to_ptr.hbm [resolvable:$true] %s40
      %s42 = sshll.u32 [#allocation7], 4
      %s43 = int_to_ptr.vmem [resolvable:$true] %s42
      %45 = dma.hbm_to_vmem [thread:$0]  %s41, 128, %s43, [#allocation6]
    $region13: #{tpu_custom_call.1} parent=1 // pred_fallthru
      _
    // Predicated region
    $region14: #{tpu_custom_call.1} parent=1 // pred_check
      _
    $region15: #{tpu_custom_call.1} parent=1 // pred_check_branch
      %47 = sbr.rel (0) target = $region17
    $region16: #{tpu_custom_call.1} parent=1 // pred_region
      %49 = dma.done [#allocation3], 128
    $region17: #{tpu_custom_call.1} parent=1 // pred_fallthru
      _
    // Predicated region
    $region18: #{tpu_custom_call.1} parent=1 // pred_check
      _
    $region19: #{tpu_custom_call.1} parent=1 // pred_check_branch
      %51 = sbr.rel (0) target = $region21
    $region20: #{tpu_custom_call.1} parent=1 // pred_region
      %53 = dma.done [#allocation6], 1536
    $region21: #{tpu_custom_call.1} parent=1 // pred_fallthru
      _
    // Predicated region
    $region22: #{tpu_custom_call.1} parent=1 // pred_check
      _
    $region23: #{tpu_custom_call.1} parent=1 // pred_check_branch
      %55 = sbr.rel (0) target = $region25
    $region24: #{tpu_custom_call.1} parent=1 // pred_region
      %57 = dma.done [#allocation6], 128
    $region25: #{tpu_custom_call.1} parent=1 // pred_fallthru
      _
    %v58 = vld [vmem:[#allocation2] sm:$0xff]
    %v59 = vld [vmem:[#allocation7] sm:$0xff]
    %v60 = vld [vmem:[#allocation5] sm:$0xff]
    %v61 = vld [vmem:[#allocation5 + $0x8] sm:$0xff]
    %v62 = vld [vmem:[#allocation5 + $0x10] sm:$0xff]
    %v63 = vld [vmem:[#allocation5 + $0x18] sm:$0xff]
    %vm64 = vcmask 261120
    %v66 = vsel %vm64, %v58, 0
    %68 = vmatpush.msra.mxu0 0.0
    %69 = vmatpush.msra.mxu0 0.0
    %70 = vmatpush.msra.mxu0 0.0
    %71 = vmatpush.msra.mxu0 0.0
    %72 = vmatpush.msra.mxu0 0.0
    %73 = vmatpush.msra.mxu0 0.0
    %74 = vmatpush.msra.mxu0 0.0
    %75 = vmatpush.msra.mxu0 0.0
    %76 = vmatpush.msra.mxu0 0.0
    %77 = vmatpush.msra.mxu0 0.0
    %78 = vmatpush.msra.mxu0 0.0
    %79 = vmatpush.msra.mxu0 0.0
    %80 = vmatpush.msra.mxu0 %v63
    %81 = vmatpush.msra.mxu0 %v62
    %82 = vmatpush.msra.mxu0 %v61
    %83 = vmatpush.msra.mxu0 %v60
    %84 = vmatmul.f32.gmra.mxu0 %v66
    %v85 = vpop.f32.mrf.mxu0
    %v86 = vadd.f32 0.0, %v85
    %87 = vdwg.mxu0
    %vm88 = vcmask 64512
    %v90 = vsel %vm88, 1.0, 0
    %92 = vmatpush.msra.mxu0 0.0
    %93 = vmatpush.msra.mxu0 0.0
    %94 = vmatpush.msra.mxu0 0.0
    %95 = vmatpush.msra.mxu0 0.0
    %96 = vmatpush.msra.mxu0 0.0
    %97 = vmatpush.msra.mxu0 0.0
    %98 = vmatpush.msra.mxu0 0.0
    %99 = vmatpush.msra.mxu0 0.0
    %100 = vmatpush.msra.mxu0 0.0
    %101 = vmatpush.msra.mxu0 0.0
    %102 = vmatpush.msra.mxu0 0.0
    %103 = vmatpush.msra.mxu0 0.0
    %104 = vmatpush.msra.mxu0 0.0
    %105 = vmatpush.msra.mxu0 0.0
    %106 = vmatpush.msra.mxu0 0.0
    %107 = vmatpush.msra.mxu0 %v86
    %108 = vmatmul.f32.gmra.mxu0 %v90
    %v109 = vpop.f32.mrf.mxu0
    %v110 = vadd.f32 0.0, %v109
    %111 = vdwg.mxu0
    %v112 = vmul.f32 %v110, 0.125
    %v113 = vperm.slane %v112, 0
    %v114 = vsub.f32 %v86, %v113
    %v115 = vmul.f32 %v114, %v114
    %116 = vmatpush.msra.mxu0 0.0
    %117 = vmatpush.msra.mxu0 0.0
    %118 = vmatpush.msra.mxu0 0.0
    %119 = vmatpush.msra.mxu0 0.0
    %120 = vmatpush.msra.mxu0 0.0
    %121 = vmatpush.msra.mxu0 0.0
    %122 = vmatpush.msra.mxu0 0.0
    %123 = vmatpush.msra.mxu0 0.0
    %124 = vmatpush.msra.mxu0 0.0
    %125 = vmatpush.msra.mxu0 0.0
    %126 = vmatpush.msra.mxu0 0.0
    %127 = vmatpush.msra.mxu0 0.0
    %128 = vmatpush.msra.mxu0 0.0
    %129 = vmatpush.msra.mxu0 0.0
    %130 = vmatpush.msra.mxu0 0.0
    %131 = vmatpush.msra.mxu0 %v115
    %132 = vmatmul.f32.gmra.mxu0 %v90
    %v133 = vpop.f32.mrf.mxu0
    %v134 = vadd.f32 0.0, %v133
    %135 = vdwg.mxu0
    %v136 = vmul.f32 %v134, 0.125
    %v137 = vadd.f32 %v136, 1e-05
    %v138 = vrsqrt.pop %v137
    %v139 = vmul.f32 %v138, %v137
    %v140 = vmul.f32 %v139, %v138
    %v141 = vmul.f32 0.5, %v140
    %v142 = vsub.f32 1.5, %v141
    %v143 = vmul.f32 %v138, %v142
    %vm144 = vweird.f32 %v137
    %vm145 = vweird.f32 %v138
    %vm146 = vmor %vm144, %vm145
    %v147 = vsel %vm146, %v138, %v143
    %v148 = vperm.slane %v147, 0
    %v149 = vmul.f32 %v114, %v148
    %v150 = vperm.slane %v59, 0
    %v151 = vmul.f32 %v149, %v150
    %v152 = vperm.slane %v59, 1
    %v153 = vadd.f32 %v151, %v152
    %v154 = vmax.f32 %v153, 0.0
    %s155 = scalar_lea.vmem [#allocation5], 32
    %v156 = vld [vmem:[%s155] sm:$0xff]
    %v157 = vld [vmem:[%s155 + $0x8] sm:$0xff]
    %v158 = vld [vmem:[%s155 + $0x10] sm:$0xff]
    %v159 = vld [vmem:[%s155 + $0x18] sm:$0xff]
    %v161 = vsel %vm64, %v154, 0
    %163 = vmatpush.msra.mxu0 0.0
    %164 = vmatpush.msra.mxu0 0.0
    %165 = vmatpush.msra.mxu0 0.0
    %166 = vmatpush.msra.mxu0 0.0
    %167 = vmatpush.msra.mxu0 0.0
    %168 = vmatpush.msra.mxu0 0.0
    %169 = vmatpush.msra.mxu0 0.0
    %170 = vmatpush.msra.mxu0 0.0
    %171 = vmatpush.msra.mxu0 0.0
    %172 = vmatpush.msra.mxu0 0.0
    %173 = vmatpush.msra.mxu0 0.0
    %174 = vmatpush.msra.mxu0 0.0
    %175 = vmatpush.msra.mxu0 %v159
    %176 = vmatpush.msra.mxu0 %v158
    %177 = vmatpush.msra.mxu0 %v157
    %178 = vmatpush.msra.mxu0 %v156
    %179 = vmatmul.f32.gmra.mxu0 %v161
    %v180 = vpop.f32.mrf.mxu0
    %v181 = vadd.f32 0.0, %v180
    %182 = vdwg.mxu0
    %183 = vmatpush.msra.mxu0 0.0
    %184 = vmatpush.msra.mxu0 0.0
    %185 = vmatpush.msra.mxu0 0.0
    %186 = vmatpush.msra.mxu0 0.0
    %187 = vmatpush.msra.mxu0 0.0
    %188 = vmatpush.msra.mxu0 0.0
    %189 = vmatpush.msra.mxu0 0.0
    %190 = vmatpush.msra.mxu0 0.0
    %191 = vmatpush.msra.mxu0 0.0
    %192 = vmatpush.msra.mxu0 0.0
    %193 = vmatpush.msra.mxu0 0.0
    %194 = vmatpush.msra.mxu0 0.0
    %195 = vmatpush.msra.mxu0 0.0
    %196 = vmatpush.msra.mxu0 0.0
    %197 = vmatpush.msra.mxu0 0.0
    %198 = vmatpush.msra.mxu0 %v181
    %199 = vmatmul.f32.gmra.mxu0 %v90
    %v200 = vpop.f32.mrf.mxu0
    %v201 = vadd.f32 0.0, %v200
    %202 = vdwg.mxu0
    %v203 = vmul.f32 %v201, 0.125
    %v204 = vperm.slane %v203, 0
    %v205 = vsub.f32 %v181, %v204
    %v206 = vmul.f32 %v205, %v205
    %207 = vmatpush.msra.mxu0 0.0
    %208 = vmatpush.msra.mxu0 0.0
    %209 = vmatpush.msra.mxu0 0.0
    %210 = vmatpush.msra.mxu0 0.0
    %211 = vmatpush.msra.mxu0 0.0
    %212 = vmatpush.msra.mxu0 0.0
    %213 = vmatpush.msra.mxu0 0.0
    %214 = vmatpush.msra.mxu0 0.0
    %215 = vmatpush.msra.mxu0 0.0
    %216 = vmatpush.msra.mxu0 0.0
    %217 = vmatpush.msra.mxu0 0.0
    %218 = vmatpush.msra.mxu0 0.0
    %219 = vmatpush.msra.mxu0 0.0
    %220 = vmatpush.msra.mxu0 0.0
    %221 = vmatpush.msra.mxu0 0.0
    %222 = vmatpush.msra.mxu0 %v206
    %223 = vmatmul.f32.gmra.mxu0 %v90
    %v224 = vpop.f32.mrf.mxu0
    %v225 = vadd.f32 0.0, %v224
    %226 = vdwg.mxu0
    %v227 = vmul.f32 %v225, 0.125
    %v228 = vadd.f32 %v227, 1e-05
    %v229 = vrsqrt.pop %v228
    %v230 = vmul.f32 %v229, %v228
    %v231 = vmul.f32 %v230, %v229
    %v232 = vmul.f32 0.5, %v231
    %v233 = vsub.f32 1.5, %v232
    %v234 = vmul.f32 %v229, %v233
    %vm235 = vweird.f32 %v228
    %vm236 = vweird.f32 %v229
    %vm237 = vmor %vm235, %vm236
    %v238 = vsel %vm237, %v229, %v234
    %v239 = vperm.slane %v238, 0
    %v240 = vmul.f32 %v205, %v239
    %v241 = vperm.slane %v59, 2
    %v242 = vmul.f32 %v240, %v241
    %v243 = vperm.slane %v59, 3
    %v244 = vadd.f32 %v242, %v243
    %v245 = vmax.f32 %v244, 0.0
    %v246 = vadd.f32 %v245, %v154
    %s247 = scalar_lea.vmem [#allocation5], 64
    %v248 = vld [vmem:[%s247] sm:$0xff]
    %v249 = vld [vmem:[%s247 + $0x8] sm:$0xff]
    %v250 = vld [vmem:[%s247 + $0x10] sm:$0xff]
    %v251 = vld [vmem:[%s247 + $0x18] sm:$0xff]
    %v253 = vsel %vm64, %v246, 0
    %255 = vmatpush.msra.mxu0 0.0
    %256 = vmatpush.msra.mxu0 0.0
    %257 = vmatpush.msra.mxu0 0.0
    %258 = vmatpush.msra.mxu0 0.0
    %259 = vmatpush.msra.mxu0 0.0
    %260 = vmatpush.msra.mxu0 0.0
    %261 = vmatpush.msra.mxu0 0.0
    %262 = vmatpush.msra.mxu0 0.0
    %263 = vmatpush.msra.mxu0 0.0
    %264 = vmatpush.msra.mxu0 0.0
    %265 = vmatpush.msra.mxu0 0.0
    %266 = vmatpush.msra.mxu0 0.0
    %267 = vmatpush.msra.mxu0 %v251
    %268 = vmatpush.msra.mxu0 %v250
    %269 = vmatpush.msra.mxu0 %v249
    %270 = vmatpush.msra.mxu0 %v248
    %271 = vmatmul.f32.gmra.mxu0 %v253
    %v272 = vpop.f32.mrf.mxu0
    %v273 = vadd.f32 0.0, %v272
    %274 = vdwg.mxu0
    %275 = vmatpush.msra.mxu0 0.0
    %276 = vmatpush.msra.mxu0 0.0
    %277 = vmatpush.msra.mxu0 0.0
    %278 = vmatpush.msra.mxu0 0.0
    %279 = vmatpush.msra.mxu0 0.0
    %280 = vmatpush.msra.mxu0 0.0
    %281 = vmatpush.msra.mxu0 0.0
    %282 = vmatpush.msra.mxu0 0.0
    %283 = vmatpush.msra.mxu0 0.0
    %284 = vmatpush.msra.mxu0 0.0
    %285 = vmatpush.msra.mxu0 0.0
    %286 = vmatpush.msra.mxu0 0.0
    %287 = vmatpush.msra.mxu0 0.0
    %288 = vmatpush.msra.mxu0 0.0
    %289 = vmatpush.msra.mxu0 0.0
    %290 = vmatpush.msra.mxu0 %v273
    %291 = vmatmul.f32.gmra.mxu0 %v90
    %v292 = vpop.f32.mrf.mxu0
    %v293 = vadd.f32 0.0, %v292
    %294 = vdwg.mxu0
    %v295 = vmul.f32 %v293, 0.125
    %v296 = vperm.slane %v295, 0
    %v297 = vsub.f32 %v273, %v296
    %v298 = vmul.f32 %v297, %v297
    %299 = vmatpush.msra.mxu0 0.0
    %300 = vmatpush.msra.mxu0 0.0
    %301 = vmatpush.msra.mxu0 0.0
    %302 = vmatpush.msra.mxu0 0.0
    %303 = vmatpush.msra.mxu0 0.0
    %304 = vmatpush.msra.mxu0 0.0
    %305 = vmatpush.msra.mxu0 0.0
    %306 = vmatpush.msra.mxu0 0.0
    %307 = vmatpush.msra.mxu0 0.0
    %308 = vmatpush.msra.mxu0 0.0
    %309 = vmatpush.msra.mxu0 0.0
    %310 = vmatpush.msra.mxu0 0.0
    %311 = vmatpush.msra.mxu0 0.0
    %312 = vmatpush.msra.mxu0 0.0
    %313 = vmatpush.msra.mxu0 0.0
    %314 = vmatpush.msra.mxu0 %v298
    %315 = vmatmul.f32.gmra.mxu0 %v90
    %v316 = vpop.f32.mrf.mxu0
    %v317 = vadd.f32 0.0, %v316
    %318 = vdwg.mxu0
    %v319 = vmul.f32 %v317, 0.125
    %v320 = vadd.f32 %v319, 1e-05
    %v321 = vrsqrt.pop %v320
    %v322 = vmul.f32 %v321, %v320
    %v323 = vmul.f32 %v322, %v321
    %v324 = vmul.f32 0.5, %v323
    %v325 = vsub.f32 1.5, %v324
    %v326 = vmul.f32 %v321, %v325
    %vm327 = vweird.f32 %v320
    %vm328 = vweird.f32 %v321
    %vm329 = vmor %vm327, %vm328
    %v330 = vsel %vm329, %v321, %v326
    %331 = vst [vmem:[#allocation8] sm:$0xff] 0.0
    %vm332 = vcmask 253952
    %333 = vst.msk [vmem:[#allocation8] sm:$0x1] %vm332, %v112
    %334 = vst.msk [vmem:[#allocation8 + $0x1] sm:$0x1] %vm332, %v147
    %335 = vst.msk [vmem:[#allocation8 + $0x2] sm:$0x1] %vm332, %v203
    %336 = vst.msk [vmem:[#allocation8 + $0x3] sm:$0x1] %vm332, %v238
    %337 = vst.msk [vmem:[#allocation8 + $0x4] sm:$0x1] %vm332, %v295
    %338 = vst.msk [vmem:[#allocation8 + $0x5] sm:$0x1] %vm332, %v330
    // Predicated region
    $region26: #{tpu_custom_call.1} parent=1 // pred_check
      _
    $region27: #{tpu_custom_call.1} parent=1 // pred_check_branch
      %340 = sbr.rel (0) target = $region29
    $region28: #{tpu_custom_call.1} parent=1 // pred_region
      %342 = vsyncadd [#allocation4], 0
      %s344 = sshll.u32 [#allocation8], 4
      %s345 = int_to_ptr.vmem [resolvable:$true] %s344
      %s346 = sshll.u32 %s3, 4
      %s347 = int_to_ptr.hbm [resolvable:$true] %s346
      %349 = dma.vmem_to_hbm [thread:$0]  %s345, 128, %s347, [#allocation4]
    $region29: #{tpu_custom_call.1} parent=1 // pred_fallthru
      _
    // Predicated region
    $region30: #{tpu_custom_call.1} parent=1 // pred_check
      _
    $region31: #{tpu_custom_call.1} parent=1 // pred_check_branch
      %351 = sbr.rel (0) target = $region33
    $region32: #{tpu_custom_call.1} parent=1 // pred_region
      %353 = dma.done [#allocation4], 128
    $region33: #{tpu_custom_call.1} parent=1 // pred_fallthru
      _
    %354 = vsyncpa [#allocation3], 1
    %355 = vsyncpa [#allocation6], 1
    %356 = vsyncpa [#allocation4], 1

</llo_original>
